<compile_context>
chip_gen: v5e
topology: v5e:2x2
jax: 0.10.0
libtpu: 0.0.40
codegen_flags: <defaults>
</compile_context>

<pallas_src>
import jax
import jax.numpy as jnp
from jax import lax
from jax.experimental import pallas as pl
from jax.experimental.pallas import tpu as pltpu


def _round_up(x, m):
    return ((x + m - 1) // m) * m


def critic_kernel(x_ref, w1_ref, b1_ref, w2_ref, b2_ref, w3_ref, b3_ref,
                  out_ref):
    """One TM-row batch tile of the Critic forward pass.

    x_ref : (TM, obs)   state tile (f32 or bf16), batch on sublanes as stored
    out   : (1, TM)     value per sample, lane-dense
    Internally activations are (64, TM): hidden on sublanes, batch on lanes.
    """
    x = x_ref[...]                                   # (TM, obs)
    w1 = w1_ref[...]                                 # (64, obs)

    # fc1: W1 @ x^T  -> (64, TM)   (contract the obs dims; q@k^T-style matmul)
    h = lax.dot_general(w1, x, (((1,), (1,)), ((), ())),
                        preferred_element_type=jnp.float32)
    h = jnp.tanh(h + b1_ref[...])                    # (64, TM), f32

    # fc2: W2 @ h -> (64, TM). Cast h to the weight dtype (no-op in f32 mode,
    # bf16 for the MXU in bf16-streaming mode); accumulate in f32.
    h = jnp.dot(w2_ref[...], h.astype(w2_ref.dtype),
                preferred_element_type=jnp.float32)
    h = jnp.tanh(h + b2_ref[...])                    # (64, TM), f32

    # fc3: N=1 head as VPU multiply + sublane (XLU) reduce -> lane-dense (1, TM)
    v = jnp.sum(h * w3_ref[...], axis=0, keepdims=True) + b3_ref[...]

    out_ref[...] = v.astype(out_ref.dtype)           # (1, TM) unmasked store


def critic_forward(state, params, *, compute_dtype=jnp.float32, max_tm=1024):
    """state: (B, obs_size) f32. Returns (B, 1) f32 values."""
    w1, b1, w2, b2, w3, b3 = params
    B, obs = state.shape
    hidden = w1.shape[0]

    # Batch tile: multiple of 128 (lane width), as big as reasonable (per-step
    # overhead ~0.35us). Double-buffered state tile stays far below the 32 MiB
    # scoped-VMEM default even on v7x (64 MiB physical).
    tm = min(max_tm, _round_up(B, 128))
    grid_b = (B + tm - 1) // tm
    b_pad = grid_b * tm
    if b_pad != B:
        state = jnp.pad(state, ((0, b_pad - B), (0, 0)))

    # Narrow-precision streaming of the HBM-heavy operands only; biases, fc3
    # weight and all elementwise math stay f32.
    x = state.astype(compute_dtype)
    w1c = w1.astype(compute_dtype)
    w2c = w2.astype(compute_dtype)

    itemsize = jnp.dtype(compute_dtype).itemsize
    flops = 2 * b_pad * (obs * hidden + hidden * hidden + hidden)
    transcendentals = 2 * hidden * b_pad
    bytes_accessed = (b_pad * obs * itemsize                 # state stream
                      + b_pad * 4                            # output
                      + (hidden * obs + hidden * hidden) * itemsize
                      + (3 * hidden + 1) * 4)                # biases + w3

    out = pl.pallas_call(
        critic_kernel,
        out_shape=jax.ShapeDtypeStruct((1, b_pad), jnp.float32),
        grid=(grid_b,),
        in_specs=[
            pl.BlockSpec((tm, obs), lambda i: (i, 0)),          # state tile
            pl.BlockSpec((hidden, obs), lambda i: (0, 0)),      # w1 (resident)
            pl.BlockSpec((hidden, 1), lambda i: (0, 0)),        # b1
            pl.BlockSpec((hidden, hidden), lambda i: (0, 0)),   # w2
            pl.BlockSpec((hidden, 1), lambda i: (0, 0)),        # b2
            pl.BlockSpec((hidden, 1), lambda i: (0, 0)),        # w3
            pl.BlockSpec((1, 1), lambda i: (0, 0)),             # b3
        ],
        out_specs=pl.BlockSpec((1, tm), lambda i: (0, i)),      # lane-dense
        compiler_params=pltpu.CompilerParams(
            dimension_semantics=("parallel",)),
        cost_estimate=pl.CostEstimate(
            flops=flops,
            transcendentals=transcendentals,
            bytes_accessed=bytes_accessed),
    )(x, w1c, b1, w2c, b2, w3, b3)

    # Drop batch padding and restore the (B, 1) module output shape.
    return out[0, :B].reshape(B, 1)


def init_critic_params(key, obs_size, hidden=64):
    """PyTorch nn.Linear-style init, stored in the kernel's layout."""
    def linear(key, fan_in, fan_out):
        kw, kb = jax.random.split(key)
        bound = fan_in ** -0.5
        w = jax.random.uniform(kw, (fan_out, fan_in), jnp.float32, -bound, bound)
        b = jax.random.uniform(kb, (fan_out, 1), jnp.float32, -bound, bound)
        return w, b

    k1, k2, k3 = jax.random.split(key, 3)
    w1, b1 = linear(k1, obs_size, hidden)   # (64, obs), (64, 1)
    w2, b2 = linear(k2, hidden, hidden)     # (64, 64),  (64, 1)
    w3t, b3 = linear(k3, hidden, 1)         # (1, 64),   (1, 1)
    return (w1, b1, w2, b2, w3t.T, b3)      # w3 stored as (64, 1)


def critic_reference(state, params):
    """Pure-JAX reference (matches the PyTorch module)."""
    w1, b1, w2, b2, w3, b3 = params
    s = jnp.tanh(state @ w1.T + b1[:, 0])
    s = jnp.tanh(s @ w2.T + b2[:, 0])
    return s @ w3 + b3                      # (B, 1)


if __name__ == "__main__":
    key = jax.random.PRNGKey(0)
    k_param, k_state = jax.random.split(key)

    batch = 8
    obs_size = 32

    params = init_critic_params(k_param, obs_size)
    state = jax.random.normal(k_state, (batch, obs_size), dtype=jnp.float32)

    v_ref = critic_reference(state, params)

    # f32 path (default): must match the reference tightly.
    v = jax.block_until_ready(critic_forward(state, params))
    assert v.shape == (batch, 1), v.shape
    assert jnp.allclose(v, v_ref, atol=1e-5, rtol=1e-5), (
        f"mismatch: max abs err {float(jnp.max(jnp.abs(v - v_ref)))}")

    # bf16-streaming path (the HBM-bound large-batch configuration).
    v_bf16 = jax.block_until_ready(
        critic_forward(state, params, compute_dtype=jnp.bfloat16))
    assert v_bf16.shape == (batch, 1), v_bf16.shape
    assert bool(jnp.all(jnp.isfinite(v_bf16)))
    assert jnp.allclose(v_bf16, v_ref, atol=1e-1, rtol=1e-1), (
        f"bf16 mismatch: max abs err {float(jnp.max(jnp.abs(v_bf16 - v_ref)))}")

    print("KERNEL_OK")
</pallas_src>

<mosaic_0001>
module attributes {stable_mosaic.version = 11 : i64} {
  func.func @critic_kernel(%arg0: i32, %arg1: memref<128x32xf32, #tpu.memory_space<vmem>>, %arg2: memref<64x32xf32, #tpu.memory_space<vmem>>, %arg3: memref<64x1xf32, #tpu.memory_space<vmem>>, %arg4: memref<64x64xf32, #tpu.memory_space<vmem>>, %arg5: memref<64x1xf32, #tpu.memory_space<vmem>>, %arg6: memref<64x1xf32, #tpu.memory_space<vmem>>, %arg7: memref<1x1xf32, #tpu.memory_space<vmem>>, %arg8: memref<1x128xf32, #tpu.memory_space<vmem>>) attributes {dimension_semantics = [#tpu.dimension_semantics<parallel>], iteration_bounds = array<i64: 1>, scalar_prefetch = 0 : i64, scratch_operands = 0 : i64, tpu.core_type = #tpu.core_type<tc>, window_params = [{transform_indices = @transform_0, window_bounds = array<i64: 128, 32>}, {pipeline_mode = #tpu.pipeline_mode<synchronous>, transform_indices = @transform_1, window_bounds = array<i64: 64, 32>}, {pipeline_mode = #tpu.pipeline_mode<synchronous>, transform_indices = @transform_2, window_bounds = array<i64: 64, 1>}, {pipeline_mode = #tpu.pipeline_mode<synchronous>, transform_indices = @transform_3, window_bounds = array<i64: 64, 64>}, {pipeline_mode = #tpu.pipeline_mode<synchronous>, transform_indices = @transform_4, window_bounds = array<i64: 64, 1>}, {pipeline_mode = #tpu.pipeline_mode<synchronous>, transform_indices = @transform_5, window_bounds = array<i64: 64, 1>}, {pipeline_mode = #tpu.pipeline_mode<synchronous>, transform_indices = @transform_6, window_bounds = array<i64: 1, 1>}, {transform_indices = @transform_7, window_bounds = array<i64: 1, 128>}]} {
    %c0 = arith.constant 0 : index
    %c0_0 = arith.constant 0 : index
    %0 = vector.load %arg1[%c0, %c0_0] : memref<128x32xf32, #tpu.memory_space<vmem>>, vector<128x32xf32>
    %c0_1 = arith.constant 0 : index
    %c0_2 = arith.constant 0 : index
    %1 = vector.load %arg2[%c0_1, %c0_2] : memref<64x32xf32, #tpu.memory_space<vmem>>, vector<64x32xf32>
    %cst = arith.constant dense<0.000000e+00> : vector<64x128xf32>
    %2 = tpu.matmul %1, %0, %cst {dimension_numbers = #tpu.dot_dimension_numbers<[1], [1], [0], [0], [0, 0, 1, 0], [], []>} : vector<64x32xf32>, vector<128x32xf32>, vector<64x128xf32> -> vector<64x128xf32>
    %c0_3 = arith.constant 0 : index
    %c0_4 = arith.constant 0 : index
    %3 = vector.load %arg3[%c0_3, %c0_4] : memref<64x1xf32, #tpu.memory_space<vmem>>, vector<64x1xf32>
    %4 = vector.broadcast %3 : vector<64x1xf32> to vector<64x128xf32>
    %5 = arith.addf %2, %4 : vector<64x128xf32>
    %6 = math.tanh %5 : vector<64x128xf32>
    %c0_5 = arith.constant 0 : index
    %c0_6 = arith.constant 0 : index
    %7 = vector.load %arg4[%c0_5, %c0_6] : memref<64x64xf32, #tpu.memory_space<vmem>>, vector<64x64xf32>
    %cst_7 = arith.constant dense<0.000000e+00> : vector<64x128xf32>
    %8 = tpu.matmul %7, %6, %cst_7 {dimension_numbers = #tpu.dot_dimension_numbers<[1], [0], [0], [1], [0, 0, 1, 1], [], []>} : vector<64x64xf32>, vector<64x128xf32>, vector<64x128xf32> -> vector<64x128xf32>
    %c0_8 = arith.constant 0 : index
    %c0_9 = arith.constant 0 : index
    %9 = vector.load %arg5[%c0_8, %c0_9] : memref<64x1xf32, #tpu.memory_space<vmem>>, vector<64x1xf32>
    %10 = vector.broadcast %9 : vector<64x1xf32> to vector<64x128xf32>
    %11 = arith.addf %8, %10 : vector<64x128xf32>
    %12 = math.tanh %11 : vector<64x128xf32>
    %c0_10 = arith.constant 0 : index
    %c0_11 = arith.constant 0 : index
    %13 = vector.load %arg6[%c0_10, %c0_11] : memref<64x1xf32, #tpu.memory_space<vmem>>, vector<64x1xf32>
    %14 = vector.broadcast %13 : vector<64x1xf32> to vector<64x128xf32>
    %15 = arith.mulf %12, %14 : vector<64x128xf32>
    %cst_12 = arith.constant dense<0.000000e+00> : vector<128xf32>
    %16 = vector.multi_reduction <add>, %15, %cst_12 [0] : vector<64x128xf32> to vector<128xf32>
    %17 = vector.shape_cast %16 : vector<128xf32> to vector<1x128xf32>
    %c0_13 = arith.constant 0 : index
    %c0_14 = arith.constant 0 : index
    %18 = vector.load %arg7[%c0_13, %c0_14] : memref<1x1xf32, #tpu.memory_space<vmem>>, vector<1x1xf32>
    %19 = vector.broadcast %18 : vector<1x1xf32> to vector<1x128xf32>
    %20 = arith.addf %17, %19 : vector<1x128xf32>
    %c0_15 = arith.constant 0 : index
    %c0_16 = arith.constant 0 : index
    %21 = vector.load %arg8[%c0_15, %c0_16] : memref<1x128xf32, #tpu.memory_space<vmem>>, vector<1x128xf32>
    tpu.vector_store %arg8[%c0_15, %c0_16], %20 {strides = array<i32>} : memref<1x128xf32, #tpu.memory_space<vmem>>, vector<1x128xf32>,
    return
  }
  func.func @transform_0(%arg0: i32) -> (i32, i32) {
    %c0_i32 = arith.constant 0 : i32
    %c0_i32_0 = arith.constant 0 : i32
    return %arg0, %c0_i32 : i32, i32
  }
  func.func @transform_1(%arg0: i32) -> (i32, i32) {
    %c0_i32 = arith.constant 0 : i32
    %c0_i32_0 = arith.constant 0 : i32
    %c0_i32_1 = arith.constant 0 : i32
    return %c0_i32, %c0_i32_0 : i32, i32
  }
  func.func @transform_2(%arg0: i32) -> (i32, i32) {
    %c0_i32 = arith.constant 0 : i32
    %c0_i32_0 = arith.constant 0 : i32
    %c0_i32_1 = arith.constant 0 : i32
    return %c0_i32, %c0_i32_0 : i32, i32
  }
  func.func @transform_3(%arg0: i32) -> (i32, i32) {
    %c0_i32 = arith.constant 0 : i32
    %c0_i32_0 = arith.constant 0 : i32
    %c0_i32_1 = arith.constant 0 : i32
    return %c0_i32, %c0_i32_0 : i32, i32
  }
  func.func @transform_4(%arg0: i32) -> (i32, i32) {
    %c0_i32 = arith.constant 0 : i32
    %c0_i32_0 = arith.constant 0 : i32
    %c0_i32_1 = arith.constant 0 : i32
    return %c0_i32, %c0_i32_0 : i32, i32
  }
  func.func @transform_5(%arg0: i32) -> (i32, i32) {
    %c0_i32 = arith.constant 0 : i32
    %c0_i32_0 = arith.constant 0 : i32
    %c0_i32_1 = arith.constant 0 : i32
    return %c0_i32, %c0_i32_0 : i32, i32
  }
  func.func @transform_6(%arg0: i32) -> (i32, i32) {
    %c0_i32 = arith.constant 0 : i32
    %c0_i32_0 = arith.constant 0 : i32
    %c0_i32_1 = arith.constant 0 : i32
    return %c0_i32, %c0_i32_0 : i32, i32
  }
  func.func @transform_7(%arg0: i32) -> (i32, i32) {
    %c0_i32 = arith.constant 0 : i32
    %c0_i32_0 = arith.constant 0 : i32
    return %c0_i32, %arg0 : i32, i32
  }
}

</mosaic_0001>

<llo_original>
// kernel: tpu_custom_call.1
$region0: #{tpu_custom_call.1}
  #allocation0 [shape = 'u32[]', space=smem, size = 0x4, offset = 0x4, fixed_abs, tag = 'smem constant byte address 0x4 - core index']
  #allocation1 [shape = 'u32[72,128]{1,0:T(1,128)}', space=vmem, size = 0x9000, scoped, tag = 'internal scratch']
  #allocation2 [shape = 'f32[1,1]{1,0:T(1,128)S(1)}', space=vmem, size = 0x200, scoped, tag = 'scoped memory for tpu_custom_call.1']
  %s0 = inlined_call_operand.vmem [shape: f32[128,32], index: 0, kind: input, shape index: {}]
  %s1 = inlined_call_operand.vmem [shape: f32[64,32], index: 1, kind: input, shape index: {}]
  %s2 = inlined_call_operand.vmem [shape: f32[64,1], index: 2, kind: input, shape index: {}]
  %s3 = inlined_call_operand.vmem [shape: f32[64,64], index: 3, kind: input, shape index: {}]
  %s4 = inlined_call_operand.vmem [shape: f32[64,1], index: 4, kind: input, shape index: {}]
  %s5 = inlined_call_operand.vmem [shape: f32[64,1], index: 5, kind: input, shape index: {}]
  %s6 = inlined_call_operand.<no memory space> [shape: f32[1,1], index: 6, kind: input, shape index: {}]
  %s7 = inlined_call_operand.hbm [shape: f32[1,128], index: 7, kind: output, shape index: {}]
  %s8 = sld [smem:[#allocation0]]
  $region38: #{tpu_custom_call.1} parent=0
    _
  %s10 = ssub.s32 1, %s8
  %s11 = scalar_select 0, %s10, %s8
  %v12 = vstv %s6
  %13 = vst [vmem:[#allocation2] sm:$0x1] %v12
  $region1: #{tpu_custom_call.1} parent=0
    #allocation3 [shape = 'u8[512]{0}', space=vmem, size = 0x400, scoped, tag = 'output window, operand 0, single buffered']
    #allocation4 [shape = 's32[1]{0}', space=sflag, size = 0x4, scoped, tag = 'scoped memory for tpu_custom_call.1']
    %14 = vsyncpa [#allocation4], 0
    // Predicated region
    $region2: #{tpu_custom_call.1} parent=1 // pred_check
      _
    $region3: #{tpu_custom_call.1} parent=1 // pred_check_branch
      %16 = sbr.rel (0) target = $region5
    $region4: #{tpu_custom_call.1} parent=1 // pred_region
      _
    $region5: #{tpu_custom_call.1} parent=1 // pred_fallthru
      _
    // Predicated region
    $region6: #{tpu_custom_call.1} parent=1 // pred_check
      _
    $region7: #{tpu_custom_call.1} parent=1 // pred_check_branch
      %18 = sbr.rel (0) target = $region9
    $region8: #{tpu_custom_call.1} parent=1 // pred_region
      _
    $region9: #{tpu_custom_call.1} parent=1 // pred_fallthru
      _
    // Predicated region
    $region10: #{tpu_custom_call.1} parent=1 // pred_check
      _
    $region11: #{tpu_custom_call.1} parent=1 // pred_check_branch
      %20 = sbr.rel (0) target = $region13
    $region12: #{tpu_custom_call.1} parent=1 // pred_region
      _
    $region13: #{tpu_custom_call.1} parent=1 // pred_fallthru
      _
    // Predicated region
    $region14: #{tpu_custom_call.1} parent=1 // pred_check
      _
    $region15: #{tpu_custom_call.1} parent=1 // pred_check_branch
      %22 = sbr.rel (0) target = $region17
    $region16: #{tpu_custom_call.1} parent=1 // pred_region
      _
    $region17: #{tpu_custom_call.1} parent=1 // pred_fallthru
      _
    // Predicated region
    $region18: #{tpu_custom_call.1} parent=1 // pred_check
      _
    $region19: #{tpu_custom_call.1} parent=1 // pred_check_branch
      %24 = sbr.rel (0) target = $region21
    $region20: #{tpu_custom_call.1} parent=1 // pred_region
      _
    $region21: #{tpu_custom_call.1} parent=1 // pred_fallthru
      _
    // Predicated region
    $region22: #{tpu_custom_call.1} parent=1 // pred_check
      _
    $region23: #{tpu_custom_call.1} parent=1 // pred_check_branch
      %26 = sbr.rel (0) target = $region25
    $region24: #{tpu_custom_call.1} parent=1 // pred_region
      _
    $region25: #{tpu_custom_call.1} parent=1 // pred_fallthru
      _
    // Predicated region
    $region26: #{tpu_custom_call.1} parent=1 // pred_check
      _
    $region27: #{tpu_custom_call.1} parent=1 // pred_check_branch
      %28 = sbr.rel (0) target = $region29
    $region28: #{tpu_custom_call.1} parent=1 // pred_region
      _
    $region29: #{tpu_custom_call.1} parent=1 // pred_fallthru
      _
    %v29 = vld [vmem:[%s0] sm:$0xff]
    %v30 = vld [vmem:[%s0 + $0x8] sm:$0xff]
    %v31 = vld [vmem:[%s0 + $0x10] sm:$0xff]
    %v32 = vld [vmem:[%s0 + $0x18] sm:$0xff]
    %v33 = vld [vmem:[%s0 + $0x20] sm:$0xff]
    %v34 = vld [vmem:[%s0 + $0x28] sm:$0xff]
    %v35 = vld [vmem:[%s0 + $0x30] sm:$0xff]
    %v36 = vld [vmem:[%s0 + $0x38] sm:$0xff]
    %v37 = vld [vmem:[%s0 + $0x40] sm:$0xff]
    %v38 = vld [vmem:[%s0 + $0x48] sm:$0xff]
    %v39 = vld [vmem:[%s0 + $0x50] sm:$0xff]
    %v40 = vld [vmem:[%s0 + $0x58] sm:$0xff]
    %v41 = vld [vmem:[%s0 + $0x60] sm:$0xff]
    %v42 = vld [vmem:[%s0 + $0x68] sm:$0xff]
    %v43 = vld [vmem:[%s0 + $0x70] sm:$0xff]
    %v44 = vld [vmem:[%s0 + $0x78] sm:$0xff]
    %v45 = vld [vmem:[%s1] sm:$0xff]
    %v46 = vld [vmem:[%s1 + $0x8] sm:$0xff]
    %v47 = vld [vmem:[%s1 + $0x10] sm:$0xff]
    %v48 = vld [vmem:[%s1 + $0x18] sm:$0xff]
    %v49 = vld [vmem:[%s1 + $0x20] sm:$0xff]
    %v50 = vld [vmem:[%s1 + $0x28] sm:$0xff]
    %v51 = vld [vmem:[%s1 + $0x30] sm:$0xff]
    %v52 = vld [vmem:[%s1 + $0x38] sm:$0xff]
    %v53 = vld [vmem:[%s2] sm:$0xff]
    %v54 = vld [vmem:[%s2 + $0x8] sm:$0xff]
    %v55 = vld [vmem:[%s2 + $0x10] sm:$0xff]
    %v56 = vld [vmem:[%s2 + $0x18] sm:$0xff]
    %v57 = vld [vmem:[%s2 + $0x20] sm:$0xff]
    %v58 = vld [vmem:[%s2 + $0x28] sm:$0xff]
    %v59 = vld [vmem:[%s2 + $0x30] sm:$0xff]
    %v60 = vld [vmem:[%s2 + $0x38] sm:$0xff]
    %62 = vset.pattern.permute.xlu0 0
    %63 = vperm.xlu0 %62, %v53
    %v64 = vpop.permute.xlu0 %63
    %67 = vset.pattern.permute.xlu0 0
    %68 = vperm.xlu0 %67, %v54
    %v69 = vpop.permute.xlu0 %68
    %72 = vset.pattern.permute.xlu0 0
    %73 = vperm.xlu0 %72, %v55
    %v74 = vpop.permute.xlu0 %73
    %77 = vset.pattern.permute.xlu0 0
    %78 = vperm.xlu0 %77, %v56
    %v79 = vpop.permute.xlu0 %78
    %82 = vset.pattern.permute.xlu0 0
    %83 = vperm.xlu0 %82, %v57
    %v84 = vpop.permute.xlu0 %83
    %87 = vset.pattern.permute.xlu0 0
    %88 = vperm.xlu0 %87, %v58
    %v89 = vpop.permute.xlu0 %88
    %92 = vset.pattern.permute.xlu0 0
    %93 = vperm.xlu0 %92, %v59
    %v94 = vpop.permute.xlu0 %93
    %97 = vset.pattern.permute.xlu0 0
    %98 = vperm.xlu0 %97, %v60
    %v99 = vpop.permute.xlu0 %98
    %vm101 = vcmask 261120
    %v103 = vsel %vm101, %v45, 0
    %v106 = vsel %vm101, %v46, 0
    %v109 = vsel %vm101, %v47, 0
    %v112 = vsel %vm101, %v48, 0
    %v115 = vsel %vm101, %v49, 0
    %v118 = vsel %vm101, %v50, 0
    %v121 = vsel %vm101, %v51, 0
    %v124 = vsel %vm101, %v52, 0
    %v127 = vsel %vm101, %v29, 0
    %v130 = vsel %vm101, %v30, 0
    %v133 = vsel %vm101, %v31, 0
    %v136 = vsel %vm101, %v32, 0
    %v139 = vsel %vm101, %v33, 0
    %v142 = vsel %vm101, %v34, 0
    %v145 = vsel %vm101, %v35, 0
    %v148 = vsel %vm101, %v36, 0
    %v151 = vsel %vm101, %v37, 0
    %v154 = vsel %vm101, %v38, 0
    %v157 = vsel %vm101, %v39, 0
    %v160 = vsel %vm101, %v40, 0
    %v163 = vsel %vm101, %v41, 0
    %v166 = vsel %vm101, %v42, 0
    %v169 = vsel %vm101, %v43, 0
    %v172 = vsel %vm101, %v44, 0
    %174 = vmatpush.xpose.msra.mxu0 %v172
    %175 = vmatpush.xpose.msra.mxu0 %v169
    %176 = vmatpush.xpose.msra.mxu0 %v166
    %177 = vmatpush.xpose.msra.mxu0 %v163
    %178 = vmatpush.xpose.msra.mxu0 %v160
    %179 = vmatpush.xpose.msra.mxu0 %v157
    %180 = vmatpush.xpose.msra.mxu0 %v154
    %181 = vmatpush.xpose.msra.mxu0 %v151
    %182 = vmatpush.xpose.msra.mxu0 %v148
    %183 = vmatpush.xpose.msra.mxu0 %v145
    %184 = vmatpush.xpose.msra.mxu0 %v142
    %185 = vmatpush.xpose.msra.mxu0 %v139
    %186 = vmatpush.xpose.msra.mxu0 %v136
    %187 = vmatpush.xpose.msra.mxu0 %v133
    %188 = vmatpush.xpose.msra.mxu0 %v130
    %189 = vmatpush.xpose.msra.mxu0 %v127
    %190 = vmatmul.f32.gmra.mxu0 %v103
    %v191 = vpop.f32.mrf.mxu0
    %v192 = vadd.f32 %v64, %v191
    %193 = vmatmul.f32.gmra.mxu0 %v106
    %v194 = vpop.f32.mrf.mxu0
    %v195 = vadd.f32 %v69, %v194
    %196 = vmatmul.f32.gmra.mxu0 %v109
    %v197 = vpop.f32.mrf.mxu0
    %v198 = vadd.f32 %v74, %v197
    %199 = vmatmul.f32.gmra.mxu0 %v112
    %v200 = vpop.f32.mrf.mxu0
    %v201 = vadd.f32 %v79, %v200
    %202 = vmatmul.f32.gmra.mxu0 %v115
    %v203 = vpop.f32.mrf.mxu0
    %v204 = vadd.f32 %v84, %v203
    %205 = vmatmul.f32.gmra.mxu0 %v118
    %v206 = vpop.f32.mrf.mxu0
    %v207 = vadd.f32 %v89, %v206
    %208 = vmatmul.f32.gmra.mxu0 %v121
    %v209 = vpop.f32.mrf.mxu0
    %v210 = vadd.f32 %v94, %v209
    %211 = vmatmul.f32.gmra.mxu0 %v124
    %v212 = vpop.f32.mrf.mxu0
    %v213 = vadd.f32 %v99, %v212
    %214 = vdwg.mxu0
    %v215 = vtanh.pop %v192
    %v216 = vtanh.pop %v195
    %v217 = vtanh.pop %v198
    %v218 = vtanh.pop %v201
    %v219 = vtanh.pop %v204
    %v220 = vtanh.pop %v207
    %v221 = vtanh.pop %v210
    %v222 = vtanh.pop %v213
    %v223 = vld [vmem:[%s3] sm:$0xff]
    %v224 = vld [vmem:[%s3 + $0x8] sm:$0xff]
    %v225 = vld [vmem:[%s3 + $0x10] sm:$0xff]
    %v226 = vld [vmem:[%s3 + $0x18] sm:$0xff]
    %v227 = vld [vmem:[%s3 + $0x20] sm:$0xff]
    %v228 = vld [vmem:[%s3 + $0x28] sm:$0xff]
    %v229 = vld [vmem:[%s3 + $0x30] sm:$0xff]
    %v230 = vld [vmem:[%s3 + $0x38] sm:$0xff]
    %v231 = vld [vmem:[%s4] sm:$0xff]
    %v232 = vld [vmem:[%s4 + $0x8] sm:$0xff]
    %v233 = vld [vmem:[%s4 + $0x10] sm:$0xff]
    %v234 = vld [vmem:[%s4 + $0x18] sm:$0xff]
    %v235 = vld [vmem:[%s4 + $0x20] sm:$0xff]
    %v236 = vld [vmem:[%s4 + $0x28] sm:$0xff]
    %v237 = vld [vmem:[%s4 + $0x30] sm:$0xff]
    %v238 = vld [vmem:[%s4 + $0x38] sm:$0xff]
    %240 = vset.pattern.permute.xlu0 0
    %241 = vperm.xlu0 %240, %v231
    %v242 = vpop.permute.xlu0 %241
    %245 = vset.pattern.permute.xlu0 0
    %246 = vperm.xlu0 %245, %v232
    %v247 = vpop.permute.xlu0 %246
    %250 = vset.pattern.permute.xlu0 0
    %251 = vperm.xlu0 %250, %v233
    %v252 = vpop.permute.xlu0 %251
    %255 = vset.pattern.permute.xlu0 0
    %256 = vperm.xlu0 %255, %v234
    %v257 = vpop.permute.xlu0 %256
    %260 = vset.pattern.permute.xlu0 0
    %261 = vperm.xlu0 %260, %v235
    %v262 = vpop.permute.xlu0 %261
    %265 = vset.pattern.permute.xlu0 0
    %266 = vperm.xlu0 %265, %v236
    %v267 = vpop.permute.xlu0 %266
    %270 = vset.pattern.permute.xlu0 0
    %271 = vperm.xlu0 %270, %v237
    %v272 = vpop.permute.xlu0 %271
    %275 = vset.pattern.permute.xlu0 0
    %276 = vperm.xlu0 %275, %v238
    %v277 = vpop.permute.xlu0 %276
    %vm279 = vcmask 523264
    %v281 = vsel %vm279, %v223, 0
    %v284 = vsel %vm279, %v224, 0
    %v287 = vsel %vm279, %v225, 0
    %v290 = vsel %vm279, %v226, 0
    %v293 = vsel %vm279, %v227, 0
    %v296 = vsel %vm279, %v228, 0
    %v299 = vsel %vm279, %v229, 0
    %v302 = vsel %vm279, %v230, 0
    %304 = vmatpush.msra.mxu0 0.0
    %305 = vmatpush.msra.mxu0 0.0
    %306 = vmatpush.msra.mxu0 0.0
    %307 = vmatpush.msra.mxu0 0.0
    %308 = vmatpush.msra.mxu0 0.0
    %309 = vmatpush.msra.mxu0 0.0
    %310 = vmatpush.msra.mxu0 0.0
    %311 = vmatpush.msra.mxu0 0.0
    %312 = vmatpush.msra.mxu0 %v222
    %313 = vmatpush.msra.mxu0 %v221
    %314 = vmatpush.msra.mxu0 %v220
    %315 = vmatpush.msra.mxu0 %v219
    %316 = vmatpush.msra.mxu0 %v218
    %317 = vmatpush.msra.mxu0 %v217
    %318 = vmatpush.msra.mxu0 %v216
    %319 = vmatpush.msra.mxu0 %v215
    %320 = vmatmul.f32.gmra.mxu0 %v281
    %v321 = vpop.f32.mrf.mxu0
    %v322 = vadd.f32 %v242, %v321
    %323 = vmatmul.f32.gmra.mxu0 %v284
    %v324 = vpop.f32.mrf.mxu0
    %v325 = vadd.f32 %v247, %v324
    %326 = vmatmul.f32.gmra.mxu0 %v287
    %v327 = vpop.f32.mrf.mxu0
    %v328 = vadd.f32 %v252, %v327
    %329 = vmatmul.f32.gmra.mxu0 %v290
    %v330 = vpop.f32.mrf.mxu0
    %v331 = vadd.f32 %v257, %v330
    %332 = vmatmul.f32.gmra.mxu0 %v293
    %v333 = vpop.f32.mrf.mxu0
    %v334 = vadd.f32 %v262, %v333
    %335 = vmatmul.f32.gmra.mxu0 %v296
    %v336 = vpop.f32.mrf.mxu0
    %v337 = vadd.f32 %v267, %v336
    %338 = vmatmul.f32.gmra.mxu0 %v299
    %v339 = vpop.f32.mrf.mxu0
    %v340 = vadd.f32 %v272, %v339
    %341 = vmatmul.f32.gmra.mxu0 %v302
    %v342 = vpop.f32.mrf.mxu0
    %v343 = vadd.f32 %v277, %v342
    %344 = vdwg.mxu0
    %v345 = vtanh.pop %v322
    %v346 = vtanh.pop %v325
    %v347 = vtanh.pop %v328
    %v348 = vtanh.pop %v331
    %v349 = vtanh.pop %v334
    %v350 = vtanh.pop %v337
    %v351 = vtanh.pop %v340
    %v352 = vtanh.pop %v343
    %v353 = vld [vmem:[%s5] sm:$0xff]
    %v354 = vld [vmem:[%s5 + $0x8] sm:$0xff]
    %v355 = vld [vmem:[%s5 + $0x10] sm:$0xff]
    %v356 = vld [vmem:[%s5 + $0x18] sm:$0xff]
    %v357 = vld [vmem:[%s5 + $0x20] sm:$0xff]
    %v358 = vld [vmem:[%s5 + $0x28] sm:$0xff]
    %v359 = vld [vmem:[%s5 + $0x30] sm:$0xff]
    %v360 = vld [vmem:[%s5 + $0x38] sm:$0xff]
    %362 = vset.pattern.permute.xlu0 0
    %363 = vperm.xlu0 %362, %v353
    %v364 = vpop.permute.xlu0 %363
    %367 = vset.pattern.permute.xlu0 0
    %368 = vperm.xlu0 %367, %v354
    %v369 = vpop.permute.xlu0 %368
    %372 = vset.pattern.permute.xlu0 0
    %373 = vperm.xlu0 %372, %v355
    %v374 = vpop.permute.xlu0 %373
    %377 = vset.pattern.permute.xlu0 0
    %378 = vperm.xlu0 %377, %v356
    %v379 = vpop.permute.xlu0 %378
    %382 = vset.pattern.permute.xlu0 0
    %383 = vperm.xlu0 %382, %v357
    %v384 = vpop.permute.xlu0 %383
    %387 = vset.pattern.permute.xlu0 0
    %388 = vperm.xlu0 %387, %v358
    %v389 = vpop.permute.xlu0 %388
    %392 = vset.pattern.permute.xlu0 0
    %393 = vperm.xlu0 %392, %v359
    %v394 = vpop.permute.xlu0 %393
    %397 = vset.pattern.permute.xlu0 0
    %398 = vperm.xlu0 %397, %v360
    %v399 = vpop.permute.xlu0 %398
    %v401 = vmul.f32 %v345, %v364
    %v402 = vmul.f32 %v346, %v369
    %v403 = vmul.f32 %v347, %v374
    %v404 = vmul.f32 %v348, %v379
    %v405 = vmul.f32 %v349, %v384
    %v406 = vmul.f32 %v350, %v389
    %v407 = vmul.f32 %v351, %v394
    %v408 = vmul.f32 %v352, %v399
    %v409 = vadd.f32 %v401, %v402
    %v410 = vadd.f32 %v409, %v403
    %v411 = vadd.f32 %v410, %v404
    %v412 = vadd.f32 %v411, %v405
    %v413 = vadd.f32 %v412, %v406
    %v414 = vadd.f32 %v413, %v407
    %v415 = vadd.f32 %v414, %v408
    %v416 = vrot.slane %v415, 4
    %v417 = vadd.f32 %v415, %v416
    %v418 = vrot.slane %v417, 2
    %v419 = vadd.f32 %v417, %v418
    %v420 = vrot.slane %v419, 1
    %v421 = vadd.f32 %v419, %v420
    %v422 = vld [vmem:[#allocation2] sm:$0x1]
    %424 = vset.pattern.permute.xlu0 0
    %425 = vperm.xlu0 %424, %v422
    %v426 = vpop.permute.xlu0 %425
    %v428 = vperm.slane %v426, 0
    %v429 = vadd.f32 %v421, %v428
    %430 = vst [vmem:[#allocation3] sm:$0x1] %v429
    // Predicated region
    $region30: #{tpu_custom_call.1} parent=1 // pred_check
      _
    $region31: #{tpu_custom_call.1} parent=1 // pred_check_branch
      %432 = sbr.rel (0) target = $region33
    $region32: #{tpu_custom_call.1} parent=1 // pred_region
      %434 = vsyncadd [#allocation4], 0
      %s436 = sshll.u32 [#allocation3], 4
      %s437 = int_to_ptr.vmem [resolvable:$true] %s436
      %s438 = sshll.u32 %s7, 4
      %s439 = int_to_ptr.hbm [resolvable:$true] %s438
      %441 = dma.vmem_to_hbm [thread:$0]  %s437, 16, %s439, [#allocation4]
    $region33: #{tpu_custom_call.1} parent=1 // pred_fallthru
      _
    // Predicated region
    $region34: #{tpu_custom_call.1} parent=1 // pred_check
      _
    $region35: #{tpu_custom_call.1} parent=1 // pred_check_branch
      %443 = sbr.rel (0) target = $region37
    $region36: #{tpu_custom_call.1} parent=1 // pred_region
      %445 = dma.done [#allocation4], 16
    $region37: #{tpu_custom_call.1} parent=1 // pred_fallthru
      _
    %446 = vsyncpa [#allocation4], 1

</llo_original>
